<compile_context>
chip_gen: v7x
topology: tpu7x:2x2x1
jax: 0.10.0
libtpu: 0.0.40
codegen_flags: <defaults>
</compile_context>

<pallas_src>
import functools

import jax
import jax.numpy as jnp
from jax import lax
from jax.experimental import pallas as pl
from jax.experimental.pallas import tpu as pltpu


def _stem_pool_kernel(x_main_ref, x_halo_ref, w_ref, out_ref, xbuf_ref, conv_ref,
                      *, l_conv):
    # x_main_ref: (1, 4*TLP, C_in)    input rows for this pooled-output tile
    # x_halo_ref: (1, 16, C_in)       next 16 input rows (halo)
    # w_ref:      (7, C_in, C_out)    conv taps
    # out_ref:    (1, TLP, C_out)     pooled output tile (channels-last)
    # xbuf_ref:   (4*TLP + 16, C_in)  f32 contiguous (halo-extended) input tile
    # conv_ref:   (2*TLP + 1, C_out)  f32 conv rows covering all pool windows
    tlp = out_ref.shape[1]
    tlm = x_main_ref.shape[1]                    # 4*TLP
    n_rows = conv_ref.shape[0]                   # 2*TLP + 1
    c_out = out_ref.shape[2]

    # Stitch main + halo into one contiguous VMEM tile (aligned offsets only).
    xbuf_ref[pl.ds(0, tlm), :] = x_main_ref[0].astype(jnp.float32)
    xbuf_ref[pl.ds(tlm, 16), :] = x_halo_ref[0].astype(jnp.float32)

    # Fused im2col: local conv row r = sum_k x[2r + k] @ W_k  (stride-2 taps).
    acc = jnp.zeros((n_rows, c_out), jnp.float32)
    for k in range(w_ref.shape[0]):
        xk = xbuf_ref[pl.ds(k, n_rows, 2), :]
        wk = w_ref[k].astype(jnp.float32)
        acc = acc + jnp.dot(xk, wk, preferred_element_type=jnp.float32)

    # Local conv row r is global conv row c0 + r with c0 = 2*tile_start - 1
    # (each pool window needs one conv row to the left).  Rows outside
    # [0, l_conv) become -inf == MaxPool1d's implicit padding.
    jp = pl.program_id(1)
    c0 = 2 * jp * tlp - 1
    ridx = c0 + lax.broadcasted_iota(jnp.int32, (n_rows, 1), 0)
    valid = jnp.logical_and(ridx >= 0, ridx < l_conv)
    conv_ref[...] = jnp.where(valid, acc, -jnp.inf)

    # MaxPool1d(k=3, s=2, p=1): pool row p covers conv rows {2p-1, 2p, 2p+1}
    # == local conv rows {2r, 2r+1, 2r+2}.
    a = conv_ref[pl.ds(0, tlp, 2), :]
    b = conv_ref[pl.ds(1, tlp, 2), :]
    c = conv_ref[pl.ds(2, tlp, 2), :]
    out_ref[0] = jnp.maximum(jnp.maximum(a, b), c).astype(out_ref.dtype)


def _stem_conv_kernel(x_main_ref, x_halo_ref, w_ref, out_ref, xbuf_ref):
    # pool=False path: Conv1d(k=3, s=1, p=1) only, same fused-tap structure.
    tlc = out_ref.shape[1]
    c_out = out_ref.shape[2]
    xbuf_ref[pl.ds(0, tlc), :] = x_main_ref[0].astype(jnp.float32)
    xbuf_ref[pl.ds(tlc, 16), :] = x_halo_ref[0].astype(jnp.float32)
    acc = jnp.zeros((tlc, c_out), jnp.float32)
    for k in range(w_ref.shape[0]):
        acc = acc + jnp.dot(xbuf_ref[pl.ds(k, tlc), :],
                            w_ref[k].astype(jnp.float32),
                            preferred_element_type=jnp.float32)
    out_ref[0] = acc.astype(out_ref.dtype)


def _round_up(v, m):
    return -(-v // m) * m


def stem_forward(x_ncl, weight, pool=True, *, compute_dtype=None,
                 tile_pool=256, tile_conv=1024):
    """Stem forward. x_ncl: (N, C_in, L); weight: (C_out, C_in, K) torch layout.
    Returns (N, C_out, L_out) to match the PyTorch module."""
    n, c_in, l = x_ncl.shape
    c_out, c_in_w, k = weight.shape
    assert c_in_w == c_in
    out_dtype = x_ncl.dtype
    cdt = jnp.dtype(compute_dtype) if compute_dtype is not None else x_ncl.dtype

    # Channels-last so C_in maps to lanes and L to sublanes inside the kernel.
    x_lc = jnp.transpose(x_ncl, (0, 2, 1)).astype(cdt)        # (N, L, C_in)
    w_k = jnp.transpose(weight, (2, 1, 0)).astype(cdt)        # (K, C_in, C_out)

    cparams = pltpu.CompilerParams(
        dimension_semantics=("parallel", "parallel"),
        vmem_limit_bytes=32 * 1024 * 1024)

    if pool:
        assert k == 7, "pool=True stem uses kernel_size=7"
        l_conv = (l + 2 * 3 - 7) // 2 + 1
        l_pool = (l_conv + 2 * 1 - 3) // 2 + 1
        if l_pool <= tile_pool:
            tlp = _round_up(l_pool, 4)            # single tile (tlp % 4 == 0)
            n_tiles = 1
        else:
            tlp = _round_up(tile_pool, 8)
            n_tiles = -(-l_pool // tlp)
        l_pool_pad = n_tiles * tlp
        l_in_tot = 4 * l_pool_pad + 16
        # left pad = 3 (conv padding) + 2 (so tile j starts at input row 4*j*tlp)
        x_sh = jnp.pad(x_lc, ((0, 0), (5, l_in_tot - l - 5), (0, 0)))

        kernel = functools.partial(_stem_pool_kernel, l_conv=l_conv)
        out_nlc = pl.pallas_call(
            kernel,
            out_shape=jax.ShapeDtypeStruct((n, l_pool_pad, c_out), out_dtype),
            grid_spec=pltpu.PrefetchScalarGridSpec(
                num_scalar_prefetch=0,
                grid=(n, n_tiles),
                in_specs=[
                    pl.BlockSpec((1, 4 * tlp, c_in), lambda b, j: (b, j, 0)),
                    pl.BlockSpec((1, 16, c_in),
                                 lambda b, j: (b, (j + 1) * (tlp // 4), 0)),
                    pl.BlockSpec((k, c_in, c_out), lambda b, j: (0, 0, 0)),
                ],
                out_specs=pl.BlockSpec((1, tlp, c_out), lambda b, j: (b, j, 0)),
                scratch_shapes=[
                    pltpu.VMEM((4 * tlp + 16, c_in), jnp.float32),
                    pltpu.VMEM((2 * tlp + 1, c_out), jnp.float32),
                ],
            ),
            compiler_params=cparams,
        )(x_sh, x_sh, w_k)
        out_nlc = out_nlc[:, :l_pool, :]
    else:
        assert k == 3, "pool=False stem uses kernel_size=3"
        l_conv = l                                 # (l + 2 - 3) + 1
        if l_conv <= tile_conv:
            tlc = _round_up(l_conv, 16)
            n_tiles = 1
        else:
            tlc = _round_up(tile_conv, 16)
            n_tiles = -(-l_conv // tlc)
        l_conv_pad = n_tiles * tlc
        l_in_tot = l_conv_pad + 16
        x_sh = jnp.pad(x_lc, ((0, 0), (1, l_in_tot - l - 1), (0, 0)))

        out_nlc = pl.pallas_call(
            _stem_conv_kernel,
            out_shape=jax.ShapeDtypeStruct((n, l_conv_pad, c_out), out_dtype),
            grid_spec=pltpu.PrefetchScalarGridSpec(
                num_scalar_prefetch=0,
                grid=(n, n_tiles),
                in_specs=[
                    pl.BlockSpec((1, tlc, c_in), lambda b, j: (b, j, 0)),
                    pl.BlockSpec((1, 16, c_in),
                                 lambda b, j: (b, (j + 1) * (tlc // 16), 0)),
                    pl.BlockSpec((k, c_in, c_out), lambda b, j: (0, 0, 0)),
                ],
                out_specs=pl.BlockSpec((1, tlc, c_out), lambda b, j: (b, j, 0)),
                scratch_shapes=[pltpu.VMEM((tlc + 16, c_in), jnp.float32)],
            ),
            compiler_params=cparams,
        )(x_sh, x_sh, w_k)
        out_nlc = out_nlc[:, :l_conv, :]

    # Back to NCL to match the PyTorch module. Keep NLC downstream to skip this.
    return jnp.transpose(out_nlc, (0, 2, 1))


def stem_reference(x_ncl, weight, pool=True):
    """Pure-JAX reference (lax conv + reduce_window) for correctness checking."""
    stride, padding = (2, 3) if pool else (1, 1)
    conv = lax.conv_general_dilated(
        x_ncl, weight, window_strides=(stride,), padding=[(padding, padding)],
        dimension_numbers=("NCH", "OIH", "NCH"))
    if pool:
        conv = lax.reduce_window(
            conv, -jnp.inf, lax.max,
            window_dimensions=(1, 1, 3), window_strides=(1, 1, 2),
            padding=[(0, 0), (0, 0), (1, 1)])
    return conv


if __name__ == "__main__":
    key = jax.random.PRNGKey(0)
    kx, kw7, kw3 = jax.random.split(key, 3)

    N, C_IN, L = 2, 4, 16       # input (N, C_in, L) -- NCL like PyTorch
    C_OUT = 32

    x = jax.random.normal(kx, (N, C_IN, L), dtype=jnp.float32)
    w7 = jax.random.normal(kw7, (C_OUT, C_IN, 7), jnp.float32) * (2.0 / (C_IN * 7)) ** 0.5
    w3 = jax.random.normal(kw3, (C_OUT, C_IN, 3), jnp.float32) * (2.0 / (C_IN * 3)) ** 0.5

    fwd = jax.jit(stem_forward,
                  static_argnames=("pool", "compute_dtype", "tile_pool", "tile_conv"))

    # pool=True (module default): Conv1d(k7,s2,p3) + MaxPool1d(k3,s2,p1)
    out = jax.block_until_ready(fwd(x, w7, pool=True))
    ref = stem_reference(x, w7, pool=True)
    assert out.shape == ref.shape, (out.shape, ref.shape)
    assert jnp.allclose(out, ref, atol=1e-4, rtol=1e-4), float(jnp.max(jnp.abs(out - ref)))

    # pool=False: Conv1d(k3,s1,p1) only
    out_np = jax.block_until_ready(fwd(x, w3, pool=False))
    ref_np = stem_reference(x, w3, pool=False)
    assert out_np.shape == ref_np.shape, (out_np.shape, ref_np.shape)
    assert jnp.allclose(out_np, ref_np, atol=1e-4, rtol=1e-4), float(jnp.max(jnp.abs(out_np - ref_np)))

    # bf16 input/weight streaming (f32 accumulation): halves HBM read traffic.
    out_bf = jax.block_until_ready(fwd(x, w7, pool=True, compute_dtype=jnp.bfloat16))
    x_bf = x.astype(jnp.bfloat16).astype(jnp.float32)
    w_bf = w7.astype(jnp.bfloat16).astype(jnp.float32)
    ref_bf = stem_reference(x_bf, w_bf, pool=True)
    assert out_bf.shape == ref_bf.shape, (out_bf.shape, ref_bf.shape)
    assert jnp.allclose(out_bf, ref_bf, atol=1e-3, rtol=1e-3), float(jnp.max(jnp.abs(out_bf - ref_bf)))

    print("KERNEL_OK")
</pallas_src>

<mosaic_0001>
module attributes {stable_mosaic.version = 11 : i64} {
  func.func @_stem_pool_kernel(%arg0: i32, %arg1: i32, %arg2: memref<1x16x4xf32, #tpu.memory_space<vmem>>, %arg3: memref<1x16x4xf32, #tpu.memory_space<vmem>>, %arg4: memref<7x4x32xf32, #tpu.memory_space<vmem>>, %arg5: memref<1x4x32xf32, #tpu.memory_space<vmem>>, %arg6: memref<32x4xf32, #tpu.memory_space<vmem>>, %arg7: memref<9x32xf32, #tpu.memory_space<vmem>>) attributes {dimension_semantics = [#tpu.dimension_semantics<parallel>, #tpu.dimension_semantics<parallel>], iteration_bounds = array<i64: 2, 1>, scalar_prefetch = 0 : i64, scratch_operands = 2 : i64, tpu.core_type = #tpu.core_type<tc>, window_params = [{transform_indices = @transform_0, window_bounds = array<i64: 1, 16, 4>}, {transform_indices = @transform_1, window_bounds = array<i64: 1, 16, 4>}, {pipeline_mode = #tpu.pipeline_mode<synchronous>, transform_indices = @transform_2, window_bounds = array<i64: 7, 4, 32>}, {transform_indices = @transform_3, window_bounds = array<i64: 1, 4, 32>}]} {
    %c0 = arith.constant 0 : index
    %c0_0 = arith.constant 0 : index
    %c0_1 = arith.constant 0 : index
    %0 = vector.load %arg2[%c0, %c0_0, %c0_1] : memref<1x16x4xf32, #tpu.memory_space<vmem>>, vector<1x16x4xf32>
    %1 = vector.shape_cast %0 : vector<1x16x4xf32> to vector<16x4xf32>
    %c0_2 = arith.constant 0 : index
    %c0_3 = arith.constant 0 : index
    %2 = vector.load %arg6[%c0_2, %c0_3] : memref<32x4xf32, #tpu.memory_space<vmem>>, vector<16x4xf32>
    tpu.vector_store %arg6[%c0_2, %c0_3], %1 {strides = array<i32>} : memref<32x4xf32, #tpu.memory_space<vmem>>, vector<16x4xf32>,
    %c0_4 = arith.constant 0 : index
    %c0_5 = arith.constant 0 : index
    %c0_6 = arith.constant 0 : index
    %3 = vector.load %arg3[%c0_4, %c0_5, %c0_6] : memref<1x16x4xf32, #tpu.memory_space<vmem>>, vector<1x16x4xf32>
    %4 = vector.shape_cast %3 : vector<1x16x4xf32> to vector<16x4xf32>
    %c16 = arith.constant 16 : index
    %c0_7 = arith.constant 0 : index
    %5 = vector.load %arg6[%c16, %c0_7] : memref<32x4xf32, #tpu.memory_space<vmem>>, vector<16x4xf32>
    tpu.vector_store %arg6[%c16, %c0_7], %4 {strides = array<i32>} : memref<32x4xf32, #tpu.memory_space<vmem>>, vector<16x4xf32>,
    %cst = arith.constant 0.000000e+00 : f32
    %6 = vector.broadcast %cst : f32 to vector<9x32xf32>
    %c0_8 = arith.constant 0 : index
    %c0_9 = arith.constant 0 : index
    %7 = tpu.strided_load %arg6[%c0_8, %c0_9] {strides = array<i32: 2, 1>} : memref<32x4xf32, #tpu.memory_space<vmem>>, vector<9x4xf32>
    %c0_10 = arith.constant 0 : index
    %c0_11 = arith.constant 0 : index
    %c0_12 = arith.constant 0 : index
    %8 = vector.load %arg4[%c0_10, %c0_11, %c0_12] : memref<7x4x32xf32, #tpu.memory_space<vmem>>, vector<1x4x32xf32>
    %9 = vector.shape_cast %8 : vector<1x4x32xf32> to vector<4x32xf32>
    %cst_13 = arith.constant dense<0.000000e+00> : vector<9x32xf32>
    %10 = tpu.matmul %7, %9, %cst_13 {dimension_numbers = #tpu.dot_dimension_numbers<[1], [0], [0], [1], [0, 0, 1, 1], [], []>} : vector<9x4xf32>, vector<4x32xf32>, vector<9x32xf32> -> vector<9x32xf32>
    %11 = arith.addf %6, %10 : vector<9x32xf32>
    %c1 = arith.constant 1 : index
    %c0_14 = arith.constant 0 : index
    %12 = tpu.strided_load %arg6[%c1, %c0_14] {strides = array<i32: 2, 1>} : memref<32x4xf32, #tpu.memory_space<vmem>>, vector<9x4xf32>
    %c1_15 = arith.constant 1 : index
    %c0_16 = arith.constant 0 : index
    %c0_17 = arith.constant 0 : index
    %13 = vector.load %arg4[%c1_15, %c0_16, %c0_17] : memref<7x4x32xf32, #tpu.memory_space<vmem>>, vector<1x4x32xf32>
    %14 = vector.shape_cast %13 : vector<1x4x32xf32> to vector<4x32xf32>
    %cst_18 = arith.constant dense<0.000000e+00> : vector<9x32xf32>
    %15 = tpu.matmul %12, %14, %cst_18 {dimension_numbers = #tpu.dot_dimension_numbers<[1], [0], [0], [1], [0, 0, 1, 1], [], []>} : vector<9x4xf32>, vector<4x32xf32>, vector<9x32xf32> -> vector<9x32xf32>
    %16 = arith.addf %11, %15 : vector<9x32xf32>
    %c2 = arith.constant 2 : index
    %c0_19 = arith.constant 0 : index
    %17 = tpu.strided_load %arg6[%c2, %c0_19] {strides = array<i32: 2, 1>} : memref<32x4xf32, #tpu.memory_space<vmem>>, vector<9x4xf32>
    %c2_20 = arith.constant 2 : index
    %c0_21 = arith.constant 0 : index
    %c0_22 = arith.constant 0 : index
    %18 = vector.load %arg4[%c2_20, %c0_21, %c0_22] : memref<7x4x32xf32, #tpu.memory_space<vmem>>, vector<1x4x32xf32>
    %19 = vector.shape_cast %18 : vector<1x4x32xf32> to vector<4x32xf32>
    %cst_23 = arith.constant dense<0.000000e+00> : vector<9x32xf32>
    %20 = tpu.matmul %17, %19, %cst_23 {dimension_numbers = #tpu.dot_dimension_numbers<[1], [0], [0], [1], [0, 0, 1, 1], [], []>} : vector<9x4xf32>, vector<4x32xf32>, vector<9x32xf32> -> vector<9x32xf32>
    %21 = arith.addf %16, %20 : vector<9x32xf32>
    %c3 = arith.constant 3 : index
    %c0_24 = arith.constant 0 : index
    %22 = tpu.strided_load %arg6[%c3, %c0_24] {strides = array<i32: 2, 1>} : memref<32x4xf32, #tpu.memory_space<vmem>>, vector<9x4xf32>
    %c3_25 = arith.constant 3 : index
    %c0_26 = arith.constant 0 : index
    %c0_27 = arith.constant 0 : index
    %23 = vector.load %arg4[%c3_25, %c0_26, %c0_27] : memref<7x4x32xf32, #tpu.memory_space<vmem>>, vector<1x4x32xf32>
    %24 = vector.shape_cast %23 : vector<1x4x32xf32> to vector<4x32xf32>
    %cst_28 = arith.constant dense<0.000000e+00> : vector<9x32xf32>
    %25 = tpu.matmul %22, %24, %cst_28 {dimension_numbers = #tpu.dot_dimension_numbers<[1], [0], [0], [1], [0, 0, 1, 1], [], []>} : vector<9x4xf32>, vector<4x32xf32>, vector<9x32xf32> -> vector<9x32xf32>
    %26 = arith.addf %21, %25 : vector<9x32xf32>
    %c4 = arith.constant 4 : index
    %c0_29 = arith.constant 0 : index
    %27 = tpu.strided_load %arg6[%c4, %c0_29] {strides = array<i32: 2, 1>} : memref<32x4xf32, #tpu.memory_space<vmem>>, vector<9x4xf32>
    %c4_30 = arith.constant 4 : index
    %c0_31 = arith.constant 0 : index
    %c0_32 = arith.constant 0 : index
    %28 = vector.load %arg4[%c4_30, %c0_31, %c0_32] : memref<7x4x32xf32, #tpu.memory_space<vmem>>, vector<1x4x32xf32>
    %29 = vector.shape_cast %28 : vector<1x4x32xf32> to vector<4x32xf32>
    %cst_33 = arith.constant dense<0.000000e+00> : vector<9x32xf32>
    %30 = tpu.matmul %27, %29, %cst_33 {dimension_numbers = #tpu.dot_dimension_numbers<[1], [0], [0], [1], [0, 0, 1, 1], [], []>} : vector<9x4xf32>, vector<4x32xf32>, vector<9x32xf32> -> vector<9x32xf32>
    %31 = arith.addf %26, %30 : vector<9x32xf32>
    %c5 = arith.constant 5 : index
    %c0_34 = arith.constant 0 : index
    %32 = tpu.strided_load %arg6[%c5, %c0_34] {strides = array<i32: 2, 1>} : memref<32x4xf32, #tpu.memory_space<vmem>>, vector<9x4xf32>
    %c5_35 = arith.constant 5 : index
    %c0_36 = arith.constant 0 : index
    %c0_37 = arith.constant 0 : index
    %33 = vector.load %arg4[%c5_35, %c0_36, %c0_37] : memref<7x4x32xf32, #tpu.memory_space<vmem>>, vector<1x4x32xf32>
    %34 = vector.shape_cast %33 : vector<1x4x32xf32> to vector<4x32xf32>
    %cst_38 = arith.constant dense<0.000000e+00> : vector<9x32xf32>
    %35 = tpu.matmul %32, %34, %cst_38 {dimension_numbers = #tpu.dot_dimension_numbers<[1], [0], [0], [1], [0, 0, 1, 1], [], []>} : vector<9x4xf32>, vector<4x32xf32>, vector<9x32xf32> -> vector<9x32xf32>
    %36 = arith.addf %31, %35 : vector<9x32xf32>
    %c6 = arith.constant 6 : index
    %c0_39 = arith.constant 0 : index
    %37 = tpu.strided_load %arg6[%c6, %c0_39] {strides = array<i32: 2, 1>} : memref<32x4xf32, #tpu.memory_space<vmem>>, vector<9x4xf32>
    %c6_40 = arith.constant 6 : index
    %c0_41 = arith.constant 0 : index
    %c0_42 = arith.constant 0 : index
    %38 = vector.load %arg4[%c6_40, %c0_41, %c0_42] : memref<7x4x32xf32, #tpu.memory_space<vmem>>, vector<1x4x32xf32>
    %39 = vector.shape_cast %38 : vector<1x4x32xf32> to vector<4x32xf32>
    %cst_43 = arith.constant dense<0.000000e+00> : vector<9x32xf32>
    %40 = tpu.matmul %37, %39, %cst_43 {dimension_numbers = #tpu.dot_dimension_numbers<[1], [0], [0], [1], [0, 0, 1, 1], [], []>} : vector<9x4xf32>, vector<4x32xf32>, vector<9x32xf32> -> vector<9x32xf32>
    %41 = arith.addf %36, %40 : vector<9x32xf32>
    %c2_i32 = arith.constant 2 : i32
    %42 = arith.muli %c2_i32, %arg1 : i32
    %c4_i32 = arith.constant 4 : i32
    %43 = arith.muli %42, %c4_i32 : i32
    %c1_i32 = arith.constant 1 : i32
    %44 = arith.subi %43, %c1_i32 : i32
    %45 = tpu.iota {dimensions = array<i32: 0>} : vector<9x1xi32>
    %46 = vector.broadcast %44 : i32 to vector<9x1xi32>
    %47 = arith.addi %46, %45 : vector<9x1xi32>
    %c0_i32 = arith.constant 0 : i32
    %48 = vector.broadcast %c0_i32 : i32 to vector<9x1xi32>
    %49 = arith.cmpi sge, %47, %48 : vector<9x1xi32>
    %c8_i32 = arith.constant 8 : i32
    %50 = vector.broadcast %c8_i32 : i32 to vector<9x1xi32>
    %51 = arith.cmpi slt, %47, %50 : vector<9x1xi32>
    %52 = arith.andi %49, %51 : vector<9x1xi1>
    %cst_44 = arith.constant 0xFF800000 : f32
    %53 = vector.shape_cast %52 : vector<9x1xi1> to vector<9x1xi1>
    %54 = vector.broadcast %53 : vector<9x1xi1> to vector<9x32xi1>
    %55 = vector.broadcast %cst_44 : f32 to vector<9x32xf32>
    %56 = arith.select %54, %41, %55 : vector<9x32xi1>, vector<9x32xf32>
    %c0_45 = arith.constant 0 : index
    %c0_46 = arith.constant 0 : index
    %57 = vector.load %arg7[%c0_45, %c0_46] : memref<9x32xf32, #tpu.memory_space<vmem>>, vector<9x32xf32>
    tpu.vector_store %arg7[%c0_45, %c0_46], %56 {strides = array<i32>} : memref<9x32xf32, #tpu.memory_space<vmem>>, vector<9x32xf32>,
    %c0_47 = arith.constant 0 : index
    %c0_48 = arith.constant 0 : index
    %58 = tpu.strided_load %arg7[%c0_47, %c0_48] {strides = array<i32: 2, 1>} : memref<9x32xf32, #tpu.memory_space<vmem>>, vector<4x32xf32>
    %c1_49 = arith.constant 1 : index
    %c0_50 = arith.constant 0 : index
    %59 = tpu.strided_load %arg7[%c1_49, %c0_50] {strides = array<i32: 2, 1>} : memref<9x32xf32, #tpu.memory_space<vmem>>, vector<4x32xf32>
    %c2_51 = arith.constant 2 : index
    %c0_52 = arith.constant 0 : index
    %60 = tpu.strided_load %arg7[%c2_51, %c0_52] {strides = array<i32: 2, 1>} : memref<9x32xf32, #tpu.memory_space<vmem>>, vector<4x32xf32>
    %61 = arith.maximumf %58, %59 : vector<4x32xf32>
    %62 = arith.maximumf %61, %60 : vector<4x32xf32>
    %c0_53 = arith.constant 0 : index
    %c0_54 = arith.constant 0 : index
    %c0_55 = arith.constant 0 : index
    %63 = vector.load %arg5[%c0_53, %c0_54, %c0_55] : memref<1x4x32xf32, #tpu.memory_space<vmem>>, vector<1x4x32xf32>
    %64 = vector.shape_cast %63 : vector<1x4x32xf32> to vector<4x32xf32>
    %65 = vector.shape_cast %62 : vector<4x32xf32> to vector<1x4x32xf32>
    tpu.vector_store %arg5[%c0_53, %c0_54, %c0_55], %65 {strides = array<i32>} : memref<1x4x32xf32, #tpu.memory_space<vmem>>, vector<1x4x32xf32>,
    return
  }
  func.func @transform_0(%arg0: i32, %arg1: i32) -> (i32, i32, i32) {
    %c0_i32 = arith.constant 0 : i32
    %c0_i32_0 = arith.constant 0 : i32
    return %arg0, %arg1, %c0_i32 : i32, i32, i32
  }
  func.func @transform_1(%arg0: i32, %arg1: i32) -> (i32, i32, i32) {
    %c1_i32 = arith.constant 1 : i32
    %0 = arith.addi %arg1, %c1_i32 : i32
    %c1_i32_0 = arith.constant 1 : i32
    %1 = arith.muli %0, %c1_i32_0 : i32
    %c0_i32 = arith.constant 0 : i32
    %c0_i32_1 = arith.constant 0 : i32
    return %arg0, %1, %c0_i32 : i32, i32, i32
  }
  func.func @transform_2(%arg0: i32, %arg1: i32) -> (i32, i32, i32) {
    %c0_i32 = arith.constant 0 : i32
    %c0_i32_0 = arith.constant 0 : i32
    %c0_i32_1 = arith.constant 0 : i32
    %c0_i32_2 = arith.constant 0 : i32
    return %c0_i32, %c0_i32_0, %c0_i32_1 : i32, i32, i32
  }
  func.func @transform_3(%arg0: i32, %arg1: i32) -> (i32, i32, i32) {
    %c0_i32 = arith.constant 0 : i32
    %c0_i32_0 = arith.constant 0 : i32
    return %arg0, %arg1, %c0_i32 : i32, i32, i32
  }
}

</mosaic_0001>

<llo_original>
// kernel: stem_forward.1
$region0: #{stem_forward.1}
  #allocation0 [shape = 'u32[]', space=smem, size = 0x4, offset = 0x4, fixed_abs, tag = 'smem constant byte address 0x4 - core index']
  #allocation1 [shape = 'u32[144,128]{1,0:T(1,128)}', space=vmem, size = 0x12000, scoped, tag = 'internal scratch']
  #allocation2 [shape = 'f32[32,4]{1,0:T(8,128)}', space=vmem, size = 0x4000, scoped, tag = 'scratch operand']
  #allocation3 [shape = 'f32[9,32]{1,0:T(8,128)}', space=vmem, size = 0x2000, scoped, tag = 'scratch operand']
  %s0 = inlined_call_operand.vmem [shape: f32[2,32,4], index: 0, kind: input, shape index: {}, may-alias: {0,1}]
  %s1 = inlined_call_operand.vmem [shape: f32[2,32,4], index: 1, kind: input, shape index: {}, may-alias: {0,1}]
  %s2 = inlined_call_operand.vmem [shape: f32[7,4,32], index: 2, kind: input, shape index: {}]
  %s3 = inlined_call_operand.hbm [shape: f32[2,4,32], index: 3, kind: output, shape index: {}]
  %s4 = sld [smem:[#allocation0]]
  $region45: #{stem_forward.1} parent=0
    _
  %s6 = ssub.s32 1, %s4
  %s7 = scalar_select 0, %s6, %s4
  $region1: #{stem_forward.1} parent=0
    #allocation4 [shape = 'u8[4096]{0}', space=vmem, size = 0x1000, scoped, tag = 'output window, operand 0']
    #allocation5 [shape = 's32[2]{0}', space=sflag, size = 0x8, scoped, tag = 'scoped memory for stem_forward.1']
    %8 = vsyncpa [#allocation5], 0
    %s9 = scalar_lea.sflag [#allocation5], 1
    %10 = vsyncpa %s9, 0
    loop: start=0, step=1, limit=4
    $region2: #{stem_forward.1} parent=1 // loop_pre_header
      _
    $region3: #{stem_forward.1} parent=1 // loop_header
      %s12 = sphi 0, %s16
      %p13 = scmp.ge.s32.totalorder %s12, 4
      %s19 = sphi 0, %s31
      %s20 = sphi 0, %s27
      %s21 = sphi 0, %s19
      %s22 = sphi 0, %s20
      %s23 = sphi 0, %s21
      %s24 = sphi 0, %s22
      %s36 = sphi 0, %s38
      %s39 = sphi 0, %s36
      %s40 = sphi 0, %s39
      %s56 = sphi 0, %s40
      %s66 = sphi 0, %s68
      %s69 = sphi 0, %s66
      %s70 = sphi 0, %s69
      %s86 = sphi 0, %s70
      %s90 = sphi 0, %s90
      %s92 = sphi 0, %s90
      %s93 = sphi 0, %s92
      %s107 = sphi 0, %s93
      %s115 = sphi 0, %s117
      %s118 = sphi 0, %s115
      %s119 = sphi 0, %s118
      %s135 = sphi 0, %s119
    $region4: #{stem_forward.1} parent=1 // loop_header_branch
      %15 = sbr.rel (%p13) target = $region8
    $region5: #{stem_forward.1} parent=1 // loop_body
      %s17 = ssub.s32 %s12, 1
      %s18 = ssub.s32 %s12, 2
      %s25 = sadd.s32 1, %s20
      %p26 = scmp.ge.s32.totalorder %s25, 1
      %s27 = scalar_select %p26, 0, %s25
      %s28 = sadd.s32 1, %s19
      %s29 = scalar_select %p26, %s28, %s19
      %p30 = scmp.ge.s32.totalorder %s29, 2
      %s31 = scalar_select %p30, 0, %s29
      %s32 = ssub.s32 %s19, %s31
      %s33 = ssub.s32 %s20, %s27
      %s34 = sor.u32 %s32, %s33
      %p35 = scmp.eq.s32.totalorder %s34, 0
      %s37 = sadd.s32 %s36, 1
      %s38 = scalar_select %p35, %s36, %s37
      %p41 = pneg %p35
      %p42 = scmp.eq.s32.totalorder %s12, 1
      %p43 = por %p41, %p42
      %p44 = scmp.ne.s32.totalorder %s36, %s39
      %p45 = scmp.eq.s32.totalorder %s12, 0
      %p46 = por %p44, %p45
      %p47 = scmp.ne.s32.totalorder %s36, %s39
      %p48 = scmp.eq.s32.totalorder %s17, 1
      %p49 = por %p47, %p48
      %p50 = scmp.ne.s32.totalorder %s39, %s40
      %p51 = scmp.eq.s32.totalorder %s17, 0
      %p52 = por %p50, %p51
      %p53 = scmp.ne.s32.totalorder %s39, %s40
      %p54 = scmp.eq.s32.totalorder %s18, 1
      %p55 = por %p53, %p54
      %p57 = scmp.ne.s32.totalorder %s40, %s56
      %p58 = scmp.eq.s32.totalorder %s18, 0
      %p59 = por %p57, %p58
      %s60 = sadd.s32 %s20, 1
      %s61 = sadd.s32 %s27, 1
      %s62 = ssub.s32 %s19, %s31
      %s63 = ssub.s32 %s60, %s61
      %s64 = sor.u32 %s62, %s63
      %p65 = scmp.eq.s32.totalorder %s64, 0
      %s67 = sadd.s32 %s66, 1
      %s68 = scalar_select %p65, %s66, %s67
      %p71 = pneg %p65
      %p72 = scmp.eq.s32.totalorder %s12, 1
      %p73 = por %p71, %p72
      %p74 = scmp.ne.s32.totalorder %s66, %s69
      %p75 = scmp.eq.s32.totalorder %s12, 0
      %p76 = por %p74, %p75
      %p77 = scmp.ne.s32.totalorder %s66, %s69
      %p78 = scmp.eq.s32.totalorder %s17, 1
      %p79 = por %p77, %p78
      %p80 = scmp.ne.s32.totalorder %s69, %s70
      %p81 = scmp.eq.s32.totalorder %s17, 0
      %p82 = por %p80, %p81
      %p83 = scmp.ne.s32.totalorder %s69, %s70
      %p84 = scmp.eq.s32.totalorder %s18, 1
      %p85 = por %p83, %p84
      %p87 = scmp.ne.s32.totalorder %s70, %s86
      %p88 = scmp.eq.s32.totalorder %s18, 0
      %p89 = por %p87, %p88
      %s91 = sadd.s32 %s90, 1
      %p94 = scmp.eq.s32.totalorder %s12, 1
      %p95 = scmp.ne.s32.totalorder %s90, %s92
      %p96 = scmp.eq.s32.totalorder %s12, 0
      %p97 = por %p95, %p96
      %p98 = scmp.ne.s32.totalorder %s90, %s92
      %p99 = scmp.eq.s32.totalorder %s17, 1
      %p100 = por %p98, %p99
      %p101 = scmp.ne.s32.totalorder %s92, %s93
      %p102 = scmp.eq.s32.totalorder %s17, 0
      %p103 = por %p101, %p102
      %p104 = scmp.ne.s32.totalorder %s92, %s93
      %p105 = scmp.eq.s32.totalorder %s18, 1
      %p106 = por %p104, %p105
      %p108 = scmp.ne.s32.totalorder %s93, %s107
      %p109 = scmp.eq.s32.totalorder %s18, 0
      %p110 = por %p108, %p109
      %s111 = ssub.s32 %s19, %s31
      %s112 = ssub.s32 %s20, %s27
      %s113 = sor.u32 %s111, %s112
      %p114 = scmp.eq.s32.totalorder %s113, 0
      %s116 = sadd.s32 %s115, 1
      %s117 = scalar_select %p114, %s115, %s116
      %p120 = pneg %p114
      %p121 = scmp.eq.s32.totalorder %s12, 1
      %p122 = por %p120, %p121
      %p123 = scmp.ne.s32.totalorder %s115, %s118
      %p124 = scmp.eq.s32.totalorder %s12, 0
      %p125 = por %p123, %p124
      %p126 = scmp.ne.s32.totalorder %s115, %s118
      %p127 = scmp.eq.s32.totalorder %s17, 1
      %p128 = por %p126, %p127
      %p129 = scmp.ne.s32.totalorder %s118, %s119
      %p130 = scmp.eq.s32.totalorder %s17, 0
      %p131 = por %p129, %p130
      %p132 = scmp.ne.s32.totalorder %s118, %s119
      %p133 = scmp.eq.s32.totalorder %s18, 1
      %p134 = por %p132, %p133
      %p136 = scmp.ne.s32.totalorder %s119, %s135
      %p137 = scmp.eq.s32.totalorder %s18, 0
      %p138 = por %p136, %p137
      %p139 = scmp.le.s32.totalorder 1, %s12
      %p140 = scmp.lt.s32.totalorder %s12, 3
      %p141 = pnand %p139, %p140
      %p142 = pneg %p141
      // Predicated region
      $region9: #{stem_forward.1} parent=5 // pred_check
        _
      $region10: #{stem_forward.1} parent=5 // pred_check_branch
        %144 = sbr.rel (%p141) target = $region12
      $region11: #{stem_forward.1} parent=5 // pred_region
        %s145 = ssub.s32 %s12, 1
        // Predicated region
        $region13: #{stem_forward.1} parent=11 // pred_check
          %p146 = pneg %p103
        $region14: #{stem_forward.1} parent=11 // pred_check_branch
          %148 = sbr.rel (%p146) target = $region16
        $region15: #{stem_forward.1} parent=11 // pred_region
          _
        $region16: #{stem_forward.1} parent=11 // pred_fallthru
          _
      $region12: #{stem_forward.1} parent=5 // pred_fallthru
        _
      %p149 = scmp.lt.s32.totalorder %s12, 2
      // Predicated region
      $region17: #{stem_forward.1} parent=5 // pred_check
        %p150 = pneg %p149
      $region18: #{stem_forward.1} parent=5 // pred_check_branch
        %152 = sbr.rel (%p150) target = $region20
      $region19: #{stem_forward.1} parent=5 // pred_region
        // Predicated region
        $region21: #{stem_forward.1} parent=19 // pred_check
          %p153 = pneg %p46
        $region22: #{stem_forward.1} parent=19 // pred_check_branch
          %155 = sbr.rel (%p153) target = $region24
        $region23: #{stem_forward.1} parent=19 // pred_region
          %s156 = smul.u32 2, %s20
          %p157 = scmp.lt.s32.totalorder %s19, 1
          %s158 = scalar_select %p157, %s19, 1
          %p159 = scmp.lt.s32.totalorder %s156, 3
          %s160 = scalar_select %p159, %s156, 3
          %s161 = smul.addr %s158, 4
          %s162 = sadd.s32 %s160, %s161
          %s163 = smul.addr %s162, 8
          %s164 = scalar_lea.vmem %s0, %s163
          %s165 = smul.u32 2, %s20
        $region24: #{stem_forward.1} parent=19 // pred_fallthru
          _
        // Predicated region
        $region25: #{stem_forward.1} parent=19 // pred_check
          %p166 = pneg %p76
        $region26: #{stem_forward.1} parent=19 // pred_check_branch
          %168 = sbr.rel (%p166) target = $region28
        $region27: #{stem_forward.1} parent=19 // pred_region
          %s169 = sadd.s32 %s20, 1
          %s170 = smul.u32 2, %s169
          %p171 = scmp.lt.s32.totalorder %s19, 1
          %s172 = scalar_select %p171, %s19, 1
          %p173 = scmp.lt.s32.totalorder %s170, 3
          %s174 = scalar_select %p173, %s170, 3
          %s175 = smul.addr %s172, 4
          %s176 = sadd.s32 %s174, %s175
          %s177 = smul.addr %s176, 8
          %s178 = scalar_lea.vmem %s1, %s177
          %s179 = sadd.s32 %s20, 1
          %s180 = smul.u32 2, %s179
        $region28: #{stem_forward.1} parent=19 // pred_fallthru
          _
      $region20: #{stem_forward.1} parent=5 // pred_fallthru
        _
      %p181 = scmp.le.s32.totalorder 1, %s12
      %p182 = scmp.lt.s32.totalorder %s12, 3
      %p183 = pnand %p181, %p182
      %p184 = pneg %p183
      // Predicated region
      $region29: #{stem_forward.1} parent=5 // pred_check
        _
      $region30: #{stem_forward.1} parent=5 // pred_check_branch
        %186 = sbr.rel (%p183) target = $region32
      $region31: #{stem_forward.1} parent=5 // pred_region
        %s187 = ssub.s32 %s12, 1
        %s188 = smul.u32 2, %s22
        %p189 = scmp.lt.s32.totalorder %s21, 1
        %s190 = scalar_select %p189, %s21, 1
        %p191 = scmp.lt.s32.totalorder %s188, 3
        %s192 = scalar_select %p191, %s188, 3
        %s193 = smul.addr %s190, 4
        %s194 = sadd.s32 %s192, %s193
        %s195 = smul.addr %s194, 8
        %s196 = scalar_lea.vmem %s0, %s195
        %p197 = pneg %p52
        %p198 = pneg %p49
        %s199 = sadd.s32 %s22, 1
        %s200 = smul.u32 2, %s199
        %p201 = scmp.lt.s32.totalorder %s21, 1
        %s202 = scalar_select %p201, %s21, 1
        %p203 = scmp.lt.s32.totalorder %s200, 3
        %s204 = scalar_select %p203, %s200, 3
        %s205 = smul.addr %s202, 4
        %s206 = sadd.s32 %s204, %s205
        %s207 = smul.addr %s206, 8
        %s208 = scalar_lea.vmem %s1, %s207
        %p209 = pneg %p82
        %p210 = pneg %p79
        %p211 = pneg %p103
        %p212 = pneg %p100
        %p213 = pneg %p131
        %p214 = pneg %p128
        %s215 = sand.u32 %s118, 1
        %s216 = scalar_lea.sflag [#allocation5], %s215
        %s217 = sand.u32 %s118, 1
        %s218 = smul.addr %s217, 4
        %s219 = scalar_lea.vmem [#allocation4], %s218
        %s220 = smul.u32 2, %s22
        %p221 = scmp.lt.s32.totalorder %s21, 1
        %s222 = scalar_select %p221, %s21, 1
        %p223 = scmp.lt.s32.totalorder %s220, 3
        %s224 = scalar_select %p223, %s220, 3
        %s225 = smul.addr %s222, 4
        %s226 = sadd.s32 %s224, %s225
        %s227 = smul.addr %s226, 8
        %s228 = scalar_lea.vmem %s0, %s227
        %s229 = smul.u32 2, %s22
        %s230 = sadd.s32 %s22, 1
        %s231 = smul.u32 2, %s230
        %p232 = scmp.lt.s32.totalorder %s21, 1
        %s233 = scalar_select %p232, %s21, 1
        %p234 = scmp.lt.s32.totalorder %s231, 3
        %s235 = scalar_select %p234, %s231, 3
        %s236 = smul.addr %s233, 4
        %s237 = sadd.s32 %s235, %s236
        %s238 = smul.addr %s237, 8
        %s239 = scalar_lea.vmem %s1, %s238
        %s240 = sadd.s32 %s22, 1
        %s241 = smul.u32 2, %s240
        %v242 = vld [vmem:[%s228] sm:$0xff]
        %v243 = vld [vmem:[%s228 + $0x8] sm:$0xff]
        %vm244 = vcmask 31744
        %245 = vst.msk [vmem:[#allocation2] sm:$0xff] %vm244, %v242
        %246 = vst.msk [vmem:[#allocation2 + $0x8] sm:$0xff] %vm244, %v243
        %v247 = vld [vmem:[%s239] sm:$0xff]
        %v248 = vld [vmem:[%s239 + $0x8] sm:$0xff]
        %249 = vst.msk [vmem:[#allocation2 + $0x10] sm:$0xff] %vm244, %v247
        %250 = vst.msk [vmem:[#allocation2 + $0x18] sm:$0xff] %vm244, %v248
        %v251 = vld [vmem:[#allocation2] ss:$2 sm:$0xff]
        %s252 = scalar_lea.vmem [#allocation2], 16
        %v253 = vld [vmem:[%s252] ss:$2 sm:$0x1]
        %v254 = vld [vmem:[%s2] sm:$0xf]
        %s255 = scalar_lea.vmem [#allocation2], 1
        %v256 = vld [vmem:[%s255] ss:$2 sm:$0xff]
        %s257 = scalar_lea.vmem [#allocation2], 17
        %v258 = vld [vmem:[%s257] ss:$2 sm:$0x1]
        %s259 = scalar_lea.vmem %s2, 4
        %v260 = vld [vmem:[%s259] sm:$0xf]
        %v262 = vsel %vm244, %v256, 0
        %v265 = vsel %vm244, %v258, 0
        %vm267 = vcmask 1043456
        %v269 = vsel %vm267, %v260, 0
        %271 = vmatprep.subr.mxu0 0.0
        %272 = vmatpush1.msra.mxu0 %v269
        %273 = vmatprep.subr.mxu0 0.0
        %274 = vmatpush1.msra.mxu0 0.0
        %275 = vmatprep.subr.mxu0 0.0
        %276 = vmatpush1.msra.mxu0 0.0
        %277 = vmatprep.subr.mxu0 0.0
        %278 = vmatpush1.msra.mxu0 0.0
        %279 = vmatprep.subr.mxu0 0.0
        %280 = vmatpush1.msra.mxu0 0.0
        %281 = vmatprep.subr.mxu0 0.0
        %282 = vmatpush1.msra.mxu0 0.0
        %283 = vmatprep.subr.mxu0 0.0
        %284 = vmatpush1.msra.mxu0 0.0
        %285 = vmatprep.subr.mxu0 0.0
        %286 = vmatpush1.msra.mxu0 0.0
        %287 = vmatprep.subr.mxu0 0.0
        %288 = vmatpush1.msra.mxu0 0.0
        %289 = vmatprep.subr.mxu0 0.0
        %290 = vmatpush1.msra.mxu0 0.0
        %291 = vmatprep.subr.mxu0 0.0
        %292 = vmatpush1.msra.mxu0 0.0
        %293 = vmatprep.subr.mxu0 0.0
        %294 = vmatpush1.msra.mxu0 0.0
        %295 = vmatprep.subr.mxu0 0.0
        %296 = vmatpush1.msra.mxu0 0.0
        %297 = vmatprep.subr.mxu0 0.0
        %298 = vmatpush1.msra.mxu0 0.0
        %299 = vmatprep.subr.mxu0 0.0
        %300 = vmatpush1.msra.mxu0 0.0
        %301 = vmatprep.subr.mxu0 0.0
        %302 = vmatpush1.msra.mxu0 0.0
        %303 = vmatprep.subr.mxu0 0.0
        %304 = vmatpush1.msra.mxu0 0.0
        %305 = vmatprep.subr.mxu0 0.0
        %306 = vmatpush1.msra.mxu0 0.0
        %307 = vmatprep.subr.mxu0 0.0
        %308 = vmatpush1.msra.mxu0 0.0
        %309 = vmatprep.subr.mxu0 0.0
        %310 = vmatpush1.msra.mxu0 0.0
        %311 = vmatprep.subr.mxu0 0.0
        %312 = vmatpush1.msra.mxu0 0.0
        %313 = vmatprep.subr.mxu0 0.0
        %314 = vmatpush1.msra.mxu0 0.0
        %315 = vmatprep.subr.mxu0 0.0
        %316 = vmatpush1.msra.mxu0 0.0
        %317 = vmatprep.subr.mxu0 0.0
        %318 = vmatpush1.msra.mxu0 0.0
        %319 = vmatprep.subr.mxu0 0.0
        %320 = vmatpush1.msra.mxu0 0.0
        %321 = vmatprep.subr.mxu0 0.0
        %322 = vmatpush1.msra.mxu0 0.0
        %323 = vmatprep.subr.mxu0 0.0
        %324 = vmatpush1.msra.mxu0 0.0
        %325 = vmatprep.subr.mxu0 0.0
        %326 = vmatpush1.msra.mxu0 0.0
        %327 = vmatprep.subr.mxu0 0.0
        %328 = vmatpush1.msra.mxu0 0.0
        %329 = vmatprep.subr.mxu0 0.0
        %330 = vmatpush1.msra.mxu0 0.0
        %331 = vmatprep.subr.mxu0 0.0
        %332 = vmatpush1.msra.mxu0 0.0
        %333 = vmatprep.subr.mxu0 0.0
        %334 = vmatpush1.msra.mxu0 0.0
        %335 = vmatprep.mubr.f32.mxu0 0.0
        %336 = vmatmul.mubr.f32.gmra.mrb[0].mxu0 %v262
        %v337 = vpop.f32.mrb[0].mxu0
        %v338 = vadd.f32 0.0, %v337
        %v339 = vpop.f32.mrb[0].mxu0
        %340 = vmatprep.mubr.f32.mxu0 0.0
        %341 = vmatmul.mubr.f32.gmra.mrb[0].mxu0 %v265
        %v342 = vpop.f32.mrb[0].mxu0
        %v343 = vadd.f32 0.0, %v342
        %v344 = vpop.f32.mrb[0].mxu0
        %345 = vdwg.mxu0
        %v347 = vsel %vm244, %v251, 0
        %v350 = vsel %vm244, %v253, 0
        %v353 = vsel %vm267, %v254, 0
        %355 = vmatprep.subr.mxu0 0.0
        %356 = vmatpush1.msra.mxu0 %v353
        %357 = vmatprep.subr.mxu0 0.0
        %358 = vmatpush1.msra.mxu0 0.0
        %359 = vmatprep.subr.mxu0 0.0
        %360 = vmatpush1.msra.mxu0 0.0
        %361 = vmatprep.subr.mxu0 0.0
        %362 = vmatpush1.msra.mxu0 0.0
        %363 = vmatprep.subr.mxu0 0.0
        %364 = vmatpush1.msra.mxu0 0.0
        %365 = vmatprep.subr.mxu0 0.0
        %366 = vmatpush1.msra.mxu0 0.0
        %367 = vmatprep.subr.mxu0 0.0
        %368 = vmatpush1.msra.mxu0 0.0
        %369 = vmatprep.subr.mxu0 0.0
        %370 = vmatpush1.msra.mxu0 0.0
        %371 = vmatprep.subr.mxu0 0.0
        %372 = vmatpush1.msra.mxu0 0.0
        %373 = vmatprep.subr.mxu0 0.0
        %374 = vmatpush1.msra.mxu0 0.0
        %375 = vmatprep.subr.mxu0 0.0
        %376 = vmatpush1.msra.mxu0 0.0
        %377 = vmatprep.subr.mxu0 0.0
        %378 = vmatpush1.msra.mxu0 0.0
        %379 = vmatprep.subr.mxu0 0.0
        %380 = vmatpush1.msra.mxu0 0.0
        %381 = vmatprep.subr.mxu0 0.0
        %382 = vmatpush1.msra.mxu0 0.0
        %383 = vmatprep.subr.mxu0 0.0
        %384 = vmatpush1.msra.mxu0 0.0
        %385 = vmatprep.subr.mxu0 0.0
        %386 = vmatpush1.msra.mxu0 0.0
        %387 = vmatprep.subr.mxu0 0.0
        %388 = vmatpush1.msra.mxu0 0.0
        %389 = vmatprep.subr.mxu0 0.0
        %390 = vmatpush1.msra.mxu0 0.0
        %391 = vmatprep.subr.mxu0 0.0
        %392 = vmatpush1.msra.mxu0 0.0
        %393 = vmatprep.subr.mxu0 0.0
        %394 = vmatpush1.msra.mxu0 0.0
        %395 = vmatprep.subr.mxu0 0.0
        %396 = vmatpush1.msra.mxu0 0.0
        %397 = vmatprep.subr.mxu0 0.0
        %398 = vmatpush1.msra.mxu0 0.0
        %399 = vmatprep.subr.mxu0 0.0
        %400 = vmatpush1.msra.mxu0 0.0
        %401 = vmatprep.subr.mxu0 0.0
        %402 = vmatpush1.msra.mxu0 0.0
        %403 = vmatprep.subr.mxu0 0.0
        %404 = vmatpush1.msra.mxu0 0.0
        %405 = vmatprep.subr.mxu0 0.0
        %406 = vmatpush1.msra.mxu0 0.0
        %407 = vmatprep.subr.mxu0 0.0
        %408 = vmatpush1.msra.mxu0 0.0
        %409 = vmatprep.subr.mxu0 0.0
        %410 = vmatpush1.msra.mxu0 0.0
        %411 = vmatprep.subr.mxu0 0.0
        %412 = vmatpush1.msra.mxu0 0.0
        %413 = vmatprep.subr.mxu0 0.0
        %414 = vmatpush1.msra.mxu0 0.0
        %415 = vmatprep.subr.mxu0 0.0
        %416 = vmatpush1.msra.mxu0 0.0
        %417 = vmatprep.subr.mxu0 0.0
        %418 = vmatpush1.msra.mxu0 0.0
        %419 = vmatprep.mubr.f32.mxu0 0.0
        %420 = vmatmul.mubr.f32.gmra.mrb[0].mxu0 %v347
        %v421 = vpop.f32.mrb[0].mxu0
        %v422 = vadd.f32 %v338, %v421
        %v423 = vpop.f32.mrb[0].mxu0
        %424 = vmatprep.mubr.f32.mxu0 0.0
        %425 = vmatmul.mubr.f32.gmra.mrb[0].mxu0 %v350
        %v426 = vpop.f32.mrb[0].mxu0
        %v427 = vadd.f32 %v343, %v426
        %v428 = vpop.f32.mrb[0].mxu0
        %429 = vdwg.mxu0
        %s430 = scalar_lea.vmem [#allocation2], 2
        %v431 = vld [vmem:[%s430] ss:$2 sm:$0xff]
        %s432 = scalar_lea.vmem [#allocation2], 18
        %v433 = vld [vmem:[%s432] ss:$2 sm:$0x1]
        %s434 = scalar_lea.vmem %s2, 8
        %v435 = vld [vmem:[%s434] sm:$0xf]
        %v437 = vsel %vm244, %v431, 0
        %v440 = vsel %vm244, %v433, 0
        %v443 = vsel %vm267, %v435, 0
        %445 = vmatprep.subr.mxu0 0.0
        %446 = vmatpush1.msra.mxu0 %v443
        %447 = vmatprep.subr.mxu0 0.0
        %448 = vmatpush1.msra.mxu0 0.0
        %449 = vmatprep.subr.mxu0 0.0
        %450 = vmatpush1.msra.mxu0 0.0
        %451 = vmatprep.subr.mxu0 0.0
        %452 = vmatpush1.msra.mxu0 0.0
        %453 = vmatprep.subr.mxu0 0.0
        %454 = vmatpush1.msra.mxu0 0.0
        %455 = vmatprep.subr.mxu0 0.0
        %456 = vmatpush1.msra.mxu0 0.0
        %457 = vmatprep.subr.mxu0 0.0
        %458 = vmatpush1.msra.mxu0 0.0
        %459 = vmatprep.subr.mxu0 0.0
        %460 = vmatpush1.msra.mxu0 0.0
        %461 = vmatprep.subr.mxu0 0.0
        %462 = vmatpush1.msra.mxu0 0.0
        %463 = vmatprep.subr.mxu0 0.0
        %464 = vmatpush1.msra.mxu0 0.0
        %465 = vmatprep.subr.mxu0 0.0
        %466 = vmatpush1.msra.mxu0 0.0
        %467 = vmatprep.subr.mxu0 0.0
        %468 = vmatpush1.msra.mxu0 0.0
        %469 = vmatprep.subr.mxu0 0.0
        %470 = vmatpush1.msra.mxu0 0.0
        %471 = vmatprep.subr.mxu0 0.0
        %472 = vmatpush1.msra.mxu0 0.0
        %473 = vmatprep.subr.mxu0 0.0
        %474 = vmatpush1.msra.mxu0 0.0
        %475 = vmatprep.subr.mxu0 0.0
        %476 = vmatpush1.msra.mxu0 0.0
        %477 = vmatprep.subr.mxu0 0.0
        %478 = vmatpush1.msra.mxu0 0.0
        %479 = vmatprep.subr.mxu0 0.0
        %480 = vmatpush1.msra.mxu0 0.0
        %481 = vmatprep.subr.mxu0 0.0
        %482 = vmatpush1.msra.mxu0 0.0
        %483 = vmatprep.subr.mxu0 0.0
        %484 = vmatpush1.msra.mxu0 0.0
        %485 = vmatprep.subr.mxu0 0.0
        %486 = vmatpush1.msra.mxu0 0.0
        %487 = vmatprep.subr.mxu0 0.0
        %488 = vmatpush1.msra.mxu0 0.0
        %489 = vmatprep.subr.mxu0 0.0
        %490 = vmatpush1.msra.mxu0 0.0
        %491 = vmatprep.subr.mxu0 0.0
        %492 = vmatpush1.msra.mxu0 0.0
        %493 = vmatprep.subr.mxu0 0.0
        %494 = vmatpush1.msra.mxu0 0.0
        %495 = vmatprep.subr.mxu0 0.0
        %496 = vmatpush1.msra.mxu0 0.0
        %497 = vmatprep.subr.mxu0 0.0
        %498 = vmatpush1.msra.mxu0 0.0
        %499 = vmatprep.subr.mxu0 0.0
        %500 = vmatpush1.msra.mxu0 0.0
        %501 = vmatprep.subr.mxu0 0.0
        %502 = vmatpush1.msra.mxu0 0.0
        %503 = vmatprep.subr.mxu0 0.0
        %504 = vmatpush1.msra.mxu0 0.0
        %505 = vmatprep.subr.mxu0 0.0
        %506 = vmatpush1.msra.mxu0 0.0
        %507 = vmatprep.subr.mxu0 0.0
        %508 = vmatpush1.msra.mxu0 0.0
        %509 = vmatprep.mubr.f32.mxu0 0.0
        %510 = vmatmul.mubr.f32.gmra.mrb[0].mxu0 %v437
        %v511 = vpop.f32.mrb[0].mxu0
        %v512 = vadd.f32 0.0, %v511
        %v513 = vpop.f32.mrb[0].mxu0
        %514 = vmatprep.mubr.f32.mxu0 0.0
        %515 = vmatmul.mubr.f32.gmra.mrb[0].mxu0 %v440
        %v516 = vpop.f32.mrb[0].mxu0
        %v517 = vadd.f32 0.0, %v516
        %v518 = vpop.f32.mrb[0].mxu0
        %519 = vdwg.mxu0
        %v520 = vadd.f32 %v422, %v512
        %v521 = vadd.f32 %v427, %v517
        %s522 = scalar_lea.vmem [#allocation2], 3
        %v523 = vld [vmem:[%s522] ss:$2 sm:$0xff]
        %s524 = scalar_lea.vmem [#allocation2], 19
        %v525 = vld [vmem:[%s524] ss:$2 sm:$0x1]
        %s526 = scalar_lea.vmem %s2, 12
        %v527 = vld [vmem:[%s526] sm:$0xf]
        %v529 = vsel %vm244, %v523, 0
        %v532 = vsel %vm244, %v525, 0
        %v535 = vsel %vm267, %v527, 0
        %537 = vmatprep.subr.mxu0 0.0
        %538 = vmatpush1.msra.mxu0 %v535
        %539 = vmatprep.subr.mxu0 0.0
        %540 = vmatpush1.msra.mxu0 0.0
        %541 = vmatprep.subr.mxu0 0.0
        %542 = vmatpush1.msra.mxu0 0.0
        %543 = vmatprep.subr.mxu0 0.0
        %544 = vmatpush1.msra.mxu0 0.0
        %545 = vmatprep.subr.mxu0 0.0
        %546 = vmatpush1.msra.mxu0 0.0
        %547 = vmatprep.subr.mxu0 0.0
        %548 = vmatpush1.msra.mxu0 0.0
        %549 = vmatprep.subr.mxu0 0.0
        %550 = vmatpush1.msra.mxu0 0.0
        %551 = vmatprep.subr.mxu0 0.0
        %552 = vmatpush1.msra.mxu0 0.0
        %553 = vmatprep.subr.mxu0 0.0
        %554 = vmatpush1.msra.mxu0 0.0
        %555 = vmatprep.subr.mxu0 0.0
        %556 = vmatpush1.msra.mxu0 0.0
        %557 = vmatprep.subr.mxu0 0.0
        %558 = vmatpush1.msra.mxu0 0.0
        %559 = vmatprep.subr.mxu0 0.0
        %560 = vmatpush1.msra.mxu0 0.0
        %561 = vmatprep.subr.mxu0 0.0
        %562 = vmatpush1.msra.mxu0 0.0
        %563 = vmatprep.subr.mxu0 0.0
        %564 = vmatpush1.msra.mxu0 0.0
        %565 = vmatprep.subr.mxu0 0.0
        %566 = vmatpush1.msra.mxu0 0.0
        %567 = vmatprep.subr.mxu0 0.0
        %568 = vmatpush1.msra.mxu0 0.0
        %569 = vmatprep.subr.mxu0 0.0
        %570 = vmatpush1.msra.mxu0 0.0
        %571 = vmatprep.subr.mxu0 0.0
        %572 = vmatpush1.msra.mxu0 0.0
        %573 = vmatprep.subr.mxu0 0.0
        %574 = vmatpush1.msra.mxu0 0.0
        %575 = vmatprep.subr.mxu0 0.0
        %576 = vmatpush1.msra.mxu0 0.0
        %577 = vmatprep.subr.mxu0 0.0
        %578 = vmatpush1.msra.mxu0 0.0
        %579 = vmatprep.subr.mxu0 0.0
        %580 = vmatpush1.msra.mxu0 0.0
        %581 = vmatprep.subr.mxu0 0.0
        %582 = vmatpush1.msra.mxu0 0.0
        %583 = vmatprep.subr.mxu0 0.0
        %584 = vmatpush1.msra.mxu0 0.0
        %585 = vmatprep.subr.mxu0 0.0
        %586 = vmatpush1.msra.mxu0 0.0
        %587 = vmatprep.subr.mxu0 0.0
        %588 = vmatpush1.msra.mxu0 0.0
        %589 = vmatprep.subr.mxu0 0.0
        %590 = vmatpush1.msra.mxu0 0.0
        %591 = vmatprep.subr.mxu0 0.0
        %592 = vmatpush1.msra.mxu0 0.0
        %593 = vmatprep.subr.mxu0 0.0
        %594 = vmatpush1.msra.mxu0 0.0
        %595 = vmatprep.subr.mxu0 0.0
        %596 = vmatpush1.msra.mxu0 0.0
        %597 = vmatprep.subr.mxu0 0.0
        %598 = vmatpush1.msra.mxu0 0.0
        %599 = vmatprep.subr.mxu0 0.0
        %600 = vmatpush1.msra.mxu0 0.0
        %601 = vmatprep.mubr.f32.mxu0 0.0
        %602 = vmatmul.mubr.f32.gmra.mrb[0].mxu0 %v529
        %v603 = vpop.f32.mrb[0].mxu0
        %v604 = vadd.f32 0.0, %v603
        %v605 = vpop.f32.mrb[0].mxu0
        %606 = vmatprep.mubr.f32.mxu0 0.0
        %607 = vmatmul.mubr.f32.gmra.mrb[0].mxu0 %v532
        %v608 = vpop.f32.mrb[0].mxu0
        %v609 = vadd.f32 0.0, %v608
        %v610 = vpop.f32.mrb[0].mxu0
        %611 = vdwg.mxu0
        %v612 = vadd.f32 %v520, %v604
        %v613 = vadd.f32 %v521, %v609
        %s614 = scalar_lea.vmem [#allocation2], 4
        %v615 = vld [vmem:[%s614] ss:$2 sm:$0xff]
        %s616 = scalar_lea.vmem [#allocation2], 20
        %v617 = vld [vmem:[%s616] ss:$2 sm:$0x1]
        %s618 = scalar_lea.vmem %s2, 16
        %v619 = vld [vmem:[%s618] sm:$0xf]
        %v621 = vsel %vm244, %v615, 0
        %v624 = vsel %vm244, %v617, 0
        %v627 = vsel %vm267, %v619, 0
        %629 = vmatprep.subr.mxu0 0.0
        %630 = vmatpush1.msra.mxu0 %v627
        %631 = vmatprep.subr.mxu0 0.0
        %632 = vmatpush1.msra.mxu0 0.0
        %633 = vmatprep.subr.mxu0 0.0
        %634 = vmatpush1.msra.mxu0 0.0
        %635 = vmatprep.subr.mxu0 0.0
        %636 = vmatpush1.msra.mxu0 0.0
        %637 = vmatprep.subr.mxu0 0.0
        %638 = vmatpush1.msra.mxu0 0.0
        %639 = vmatprep.subr.mxu0 0.0
        %640 = vmatpush1.msra.mxu0 0.0
        %641 = vmatprep.subr.mxu0 0.0
        %642 = vmatpush1.msra.mxu0 0.0
        %643 = vmatprep.subr.mxu0 0.0
        %644 = vmatpush1.msra.mxu0 0.0
        %645 = vmatprep.subr.mxu0 0.0
        %646 = vmatpush1.msra.mxu0 0.0
        %647 = vmatprep.subr.mxu0 0.0
        %648 = vmatpush1.msra.mxu0 0.0
        %649 = vmatprep.subr.mxu0 0.0
        %650 = vmatpush1.msra.mxu0 0.0
        %651 = vmatprep.subr.mxu0 0.0
        %652 = vmatpush1.msra.mxu0 0.0
        %653 = vmatprep.subr.mxu0 0.0
        %654 = vmatpush1.msra.mxu0 0.0
        %655 = vmatprep.subr.mxu0 0.0
        %656 = vmatpush1.msra.mxu0 0.0
        %657 = vmatprep.subr.mxu0 0.0
        %658 = vmatpush1.msra.mxu0 0.0
        %659 = vmatprep.subr.mxu0 0.0
        %660 = vmatpush1.msra.mxu0 0.0
        %661 = vmatprep.subr.mxu0 0.0
        %662 = vmatpush1.msra.mxu0 0.0
        %663 = vmatprep.subr.mxu0 0.0
        %664 = vmatpush1.msra.mxu0 0.0
        %665 = vmatprep.subr.mxu0 0.0
        %666 = vmatpush1.msra.mxu0 0.0
        %667 = vmatprep.subr.mxu0 0.0
        %668 = vmatpush1.msra.mxu0 0.0
        %669 = vmatprep.subr.mxu0 0.0
        %670 = vmatpush1.msra.mxu0 0.0
        %671 = vmatprep.subr.mxu0 0.0
        %672 = vmatpush1.msra.mxu0 0.0
        %673 = vmatprep.subr.mxu0 0.0
        %674 = vmatpush1.msra.mxu0 0.0
        %675 = vmatprep.subr.mxu0 0.0
        %676 = vmatpush1.msra.mxu0 0.0
        %677 = vmatprep.subr.mxu0 0.0
        %678 = vmatpush1.msra.mxu0 0.0
        %679 = vmatprep.subr.mxu0 0.0
        %680 = vmatpush1.msra.mxu0 0.0
        %681 = vmatprep.subr.mxu0 0.0
        %682 = vmatpush1.msra.mxu0 0.0
        %683 = vmatprep.subr.mxu0 0.0
        %684 = vmatpush1.msra.mxu0 0.0
        %685 = vmatprep.subr.mxu0 0.0
        %686 = vmatpush1.msra.mxu0 0.0
        %687 = vmatprep.subr.mxu0 0.0
        %688 = vmatpush1.msra.mxu0 0.0
        %689 = vmatprep.subr.mxu0 0.0
        %690 = vmatpush1.msra.mxu0 0.0
        %691 = vmatprep.subr.mxu0 0.0
        %692 = vmatpush1.msra.mxu0 0.0
        %693 = vmatprep.mubr.f32.mxu0 0.0
        %694 = vmatmul.mubr.f32.gmra.mrb[0].mxu0 %v621
        %v695 = vpop.f32.mrb[0].mxu0
        %v696 = vadd.f32 0.0, %v695
        %v697 = vpop.f32.mrb[0].mxu0
        %698 = vmatprep.mubr.f32.mxu0 0.0
        %699 = vmatmul.mubr.f32.gmra.mrb[0].mxu0 %v624
        %v700 = vpop.f32.mrb[0].mxu0
        %v701 = vadd.f32 0.0, %v700
        %v702 = vpop.f32.mrb[0].mxu0
        %703 = vdwg.mxu0
        %v704 = vadd.f32 %v612, %v696
        %v705 = vadd.f32 %v613, %v701
        %s706 = scalar_lea.vmem [#allocation2], 5
        %v707 = vld [vmem:[%s706] ss:$2 sm:$0xff]
        %s708 = scalar_lea.vmem [#allocation2], 21
        %v709 = vld [vmem:[%s708] ss:$2 sm:$0x1]
        %s710 = scalar_lea.vmem %s2, 20
        %v711 = vld [vmem:[%s710] sm:$0xf]
        %v713 = vsel %vm244, %v707, 0
        %v716 = vsel %vm244, %v709, 0
        %v719 = vsel %vm267, %v711, 0
        %721 = vmatprep.subr.mxu0 0.0
        %722 = vmatpush1.msra.mxu0 %v719
        %723 = vmatprep.subr.mxu0 0.0
        %724 = vmatpush1.msra.mxu0 0.0
        %725 = vmatprep.subr.mxu0 0.0
        %726 = vmatpush1.msra.mxu0 0.0
        %727 = vmatprep.subr.mxu0 0.0
        %728 = vmatpush1.msra.mxu0 0.0
        %729 = vmatprep.subr.mxu0 0.0
        %730 = vmatpush1.msra.mxu0 0.0
        %731 = vmatprep.subr.mxu0 0.0
        %732 = vmatpush1.msra.mxu0 0.0
        %733 = vmatprep.subr.mxu0 0.0
        %734 = vmatpush1.msra.mxu0 0.0
        %735 = vmatprep.subr.mxu0 0.0
        %736 = vmatpush1.msra.mxu0 0.0
        %737 = vmatprep.subr.mxu0 0.0
        %738 = vmatpush1.msra.mxu0 0.0
        %739 = vmatprep.subr.mxu0 0.0
        %740 = vmatpush1.msra.mxu0 0.0
        %741 = vmatprep.subr.mxu0 0.0
        %742 = vmatpush1.msra.mxu0 0.0
        %743 = vmatprep.subr.mxu0 0.0
        %744 = vmatpush1.msra.mxu0 0.0
        %745 = vmatprep.subr.mxu0 0.0
        %746 = vmatpush1.msra.mxu0 0.0
        %747 = vmatprep.subr.mxu0 0.0
        %748 = vmatpush1.msra.mxu0 0.0
        %749 = vmatprep.subr.mxu0 0.0
        %750 = vmatpush1.msra.mxu0 0.0
        %751 = vmatprep.subr.mxu0 0.0
        %752 = vmatpush1.msra.mxu0 0.0
        %753 = vmatprep.subr.mxu0 0.0
        %754 = vmatpush1.msra.mxu0 0.0
        %755 = vmatprep.subr.mxu0 0.0
        %756 = vmatpush1.msra.mxu0 0.0
        %757 = vmatprep.subr.mxu0 0.0
        %758 = vmatpush1.msra.mxu0 0.0
        %759 = vmatprep.subr.mxu0 0.0
        %760 = vmatpush1.msra.mxu0 0.0
        %761 = vmatprep.subr.mxu0 0.0
        %762 = vmatpush1.msra.mxu0 0.0
        %763 = vmatprep.subr.mxu0 0.0
        %764 = vmatpush1.msra.mxu0 0.0
        %765 = vmatprep.subr.mxu0 0.0
        %766 = vmatpush1.msra.mxu0 0.0
        %767 = vmatprep.subr.mxu0 0.0
        %768 = vmatpush1.msra.mxu0 0.0
        %769 = vmatprep.subr.mxu0 0.0
        %770 = vmatpush1.msra.mxu0 0.0
        %771 = vmatprep.subr.mxu0 0.0
        %772 = vmatpush1.msra.mxu0 0.0
        %773 = vmatprep.subr.mxu0 0.0
        %774 = vmatpush1.msra.mxu0 0.0
        %775 = vmatprep.subr.mxu0 0.0
        %776 = vmatpush1.msra.mxu0 0.0
        %777 = vmatprep.subr.mxu0 0.0
        %778 = vmatpush1.msra.mxu0 0.0
        %779 = vmatprep.subr.mxu0 0.0
        %780 = vmatpush1.msra.mxu0 0.0
        %781 = vmatprep.subr.mxu0 0.0
        %782 = vmatpush1.msra.mxu0 0.0
        %783 = vmatprep.subr.mxu0 0.0
        %784 = vmatpush1.msra.mxu0 0.0
        %785 = vmatprep.mubr.f32.mxu0 0.0
        %786 = vmatmul.mubr.f32.gmra.mrb[0].mxu0 %v713
        %v787 = vpop.f32.mrb[0].mxu0
        %v788 = vadd.f32 0.0, %v787
        %v789 = vpop.f32.mrb[0].mxu0
        %790 = vmatprep.mubr.f32.mxu0 0.0
        %791 = vmatmul.mubr.f32.gmra.mrb[0].mxu0 %v716
        %v792 = vpop.f32.mrb[0].mxu0
        %v793 = vadd.f32 0.0, %v792
        %v794 = vpop.f32.mrb[0].mxu0
        %795 = vdwg.mxu0
        %v796 = vadd.f32 %v704, %v788
        %v797 = vadd.f32 %v705, %v793
        %s798 = scalar_lea.vmem [#allocation2], 6
        %v799 = vld [vmem:[%s798] ss:$2 sm:$0xff]
        %s800 = scalar_lea.vmem [#allocation2], 22
        %v801 = vld [vmem:[%s800] ss:$2 sm:$0x1]
        %s802 = scalar_lea.vmem %s2, 24
        %v803 = vld [vmem:[%s802] sm:$0xf]
        %v805 = vsel %vm244, %v799, 0
        %v808 = vsel %vm244, %v801, 0
        %v811 = vsel %vm267, %v803, 0
        %813 = vmatprep.subr.mxu0 0.0
        %814 = vmatpush1.msra.mxu0 %v811
        %815 = vmatprep.subr.mxu0 0.0
        %816 = vmatpush1.msra.mxu0 0.0
        %817 = vmatprep.subr.mxu0 0.0
        %818 = vmatpush1.msra.mxu0 0.0
        %819 = vmatprep.subr.mxu0 0.0
        %820 = vmatpush1.msra.mxu0 0.0
        %821 = vmatprep.subr.mxu0 0.0
        %822 = vmatpush1.msra.mxu0 0.0
        %823 = vmatprep.subr.mxu0 0.0
        %824 = vmatpush1.msra.mxu0 0.0
        %825 = vmatprep.subr.mxu0 0.0
        %826 = vmatpush1.msra.mxu0 0.0
        %827 = vmatprep.subr.mxu0 0.0
        %828 = vmatpush1.msra.mxu0 0.0
        %829 = vmatprep.subr.mxu0 0.0
        %830 = vmatpush1.msra.mxu0 0.0
        %831 = vmatprep.subr.mxu0 0.0
        %832 = vmatpush1.msra.mxu0 0.0
        %833 = vmatprep.subr.mxu0 0.0
        %834 = vmatpush1.msra.mxu0 0.0
        %835 = vmatprep.subr.mxu0 0.0
        %836 = vmatpush1.msra.mxu0 0.0
        %837 = vmatprep.subr.mxu0 0.0
        %838 = vmatpush1.msra.mxu0 0.0
        %839 = vmatprep.subr.mxu0 0.0
        %840 = vmatpush1.msra.mxu0 0.0
        %841 = vmatprep.subr.mxu0 0.0
        %842 = vmatpush1.msra.mxu0 0.0
        %843 = vmatprep.subr.mxu0 0.0
        %844 = vmatpush1.msra.mxu0 0.0
        %845 = vmatprep.subr.mxu0 0.0
        %846 = vmatpush1.msra.mxu0 0.0
        %847 = vmatprep.subr.mxu0 0.0
        %848 = vmatpush1.msra.mxu0 0.0
        %849 = vmatprep.subr.mxu0 0.0
        %850 = vmatpush1.msra.mxu0 0.0
        %851 = vmatprep.subr.mxu0 0.0
        %852 = vmatpush1.msra.mxu0 0.0
        %853 = vmatprep.subr.mxu0 0.0
        %854 = vmatpush1.msra.mxu0 0.0
        %855 = vmatprep.subr.mxu0 0.0
        %856 = vmatpush1.msra.mxu0 0.0
        %857 = vmatprep.subr.mxu0 0.0
        %858 = vmatpush1.msra.mxu0 0.0
        %859 = vmatprep.subr.mxu0 0.0
        %860 = vmatpush1.msra.mxu0 0.0
        %861 = vmatprep.subr.mxu0 0.0
        %862 = vmatpush1.msra.mxu0 0.0
        %863 = vmatprep.subr.mxu0 0.0
        %864 = vmatpush1.msra.mxu0 0.0
        %865 = vmatprep.subr.mxu0 0.0
        %866 = vmatpush1.msra.mxu0 0.0
        %867 = vmatprep.subr.mxu0 0.0
        %868 = vmatpush1.msra.mxu0 0.0
        %869 = vmatprep.subr.mxu0 0.0
        %870 = vmatpush1.msra.mxu0 0.0
        %871 = vmatprep.subr.mxu0 0.0
        %872 = vmatpush1.msra.mxu0 0.0
        %873 = vmatprep.subr.mxu0 0.0
        %874 = vmatpush1.msra.mxu0 0.0
        %875 = vmatprep.subr.mxu0 0.0
        %876 = vmatpush1.msra.mxu0 0.0
        %877 = vmatprep.mubr.f32.mxu0 0.0
        %878 = vmatmul.mubr.f32.gmra.mrb[0].mxu0 %v805
        %v879 = vpop.f32.mrb[0].mxu0
        %v880 = vadd.f32 0.0, %v879
        %v881 = vpop.f32.mrb[0].mxu0
        %882 = vmatprep.mubr.f32.mxu0 0.0
        %883 = vmatmul.mubr.f32.gmra.mrb[0].mxu0 %v808
        %v884 = vpop.f32.mrb[0].mxu0
        %v885 = vadd.f32 0.0, %v884
        %v886 = vpop.f32.mrb[0].mxu0
        %887 = vdwg.mxu0
        %v888 = vadd.f32 %v796, %v880
        %v889 = vadd.f32 %v797, %v885
        %s890 = smul.u32 %s22, 8
        %s891 = ssub.s32 %s890, 1
        %v892 = vlaneseq
        %v893 = vshrl.u32 %v892, 7
        %v894 = vadd.s32 %v893, 8
        %v895 = vstv %s891
        %v896 = vadd.s32 %v895, %v893
        %v897 = vadd.s32 %v895, %v894
        %vm898 = vcmp.ge.s32.totalorder %v896, 0
        %vm899 = vcmp.ge.s32.totalorder %v897, 0
        %vm900 = vcmp.lt.s32.totalorder %v896, 8
        %vm901 = vcmp.lt.s32.totalorder %v897, 8
        %vm902 = vmand %vm898, %vm900
        %vm903 = vmand %vm899, %vm901
        %v904 = vsel %vm902, 1, 0
        %v905 = vsel %vm903, 1, 0
        %vm906 = vcmp.eq.s32.totalorder %v904, 1
        %vm907 = vcmp.eq.s32.totalorder %v905, 1
        %v908 = vsel %vm906, %v888, -inf
        %v909 = vsel %vm907, %v889, -inf
        %vm910 = vcmask 261120
        %911 = vst.msk [vmem:[#allocation3] sm:$0xff] %vm910, %v908
        %vm912 = vcmask 253952
        %913 = vst.msk [vmem:[#allocation3 + $0x8] sm:$0x1] %vm912, %v909
        %v914 = vld [vmem:[#allocation3] ss:$2 sm:$0xf]
        %s915 = scalar_lea.vmem [#allocation3], 1
        %v916 = vld [vmem:[%s915] ss:$2 sm:$0xf]
        %s917 = scalar_lea.vmem [#allocation3], 2
        %v918 = vld [vmem:[%s917] ss:$2 sm:$0xf]
        %v919 = vmax.f32 %v914, %v916
        %v920 = vmax.f32 %v919, %v918
        %vm921 = vcmask 257024
        %922 = vst.msk [vmem:[%s219] sm:$0xf] %vm921, %v920
        %s923 = sand.u32 %s118, 1
        %s924 = scalar_lea.sflag [#allocation5], %s923
        %s925 = sand.u32 %s118, 1
        %s926 = smul.addr %s925, 4
        %s927 = scalar_lea.vmem [#allocation4], %s926
        // Predicated region
        $region33: #{stem_forward.1} parent=31 // pred_check
          %p928 = pneg %p128
        $region34: #{stem_forward.1} parent=31 // pred_check_branch
          %930 = sbr.rel (%p928) target = $region36
        $region35: #{stem_forward.1} parent=31 // pred_region
          %s932 = ssub.s32 64, 64
          %933 = vsyncadd %s924, %s932
          %s934 = sadd.s32 %s22, %s21
          %s935 = smul.addr %s934, 64
          %s936 = scalar_lea.hbm %s3, %s935
          %s938 = sshll.u32 %s927, 4
          %s939 = int_to_ptr.vmem [resolvable:$true] %s938
          %941 = dma.vmem_to_hbm [thread:$0]  %s939, 64, %s936, %s924
        $region36: #{stem_forward.1} parent=31 // pred_fallthru
          _
      $region32: #{stem_forward.1} parent=5 // pred_fallthru
        _
      %p942 = scmp.le.s32.totalorder 2, %s12
      // Predicated region
      $region37: #{stem_forward.1} parent=5 // pred_check
        %p943 = pneg %p942
      $region38: #{stem_forward.1} parent=5 // pred_check_branch
        %945 = sbr.rel (%p943) target = $region40
      $region39: #{stem_forward.1} parent=5 // pred_region
        %s946 = ssub.s32 %s12, 2
        // Predicated region
        $region41: #{stem_forward.1} parent=39 // pred_check
          %p947 = pneg %p134
        $region42: #{stem_forward.1} parent=39 // pred_check_branch
          %949 = sbr.rel (%p947) target = $region44
        $region43: #{stem_forward.1} parent=39 // pred_region
          %s950 = sand.u32 %s119, 1
          %s951 = scalar_lea.sflag [#allocation5], %s950
          %s952 = sand.u32 %s119, 1
          %s953 = smul.addr %s952, 4
          %s954 = scalar_lea.vmem [#allocation4], %s953
          %955 = dma.done %s951, 64
        $region44: #{stem_forward.1} parent=39 // pred_fallthru
          _
      $region40: #{stem_forward.1} parent=5 // pred_fallthru
        _
    $region6: #{stem_forward.1} parent=1 // loop_footer
      %s16 = sadd.s32 1, %s12
    $region7: #{stem_forward.1} parent=1 // loop_footer_branch
      %11 = sbr.rel target = $region3
    $region8: #{stem_forward.1} parent=1 // loop_exit
      _
    %956 = vsyncpa [#allocation5], 1
    %s957 = scalar_lea.sflag [#allocation5], 1
    %958 = vsyncpa %s957, 1

</llo_original>
